<compile_context>
chip_gen: v5e
topology: v5e:2x2
jax: 0.10.0
libtpu: 0.0.40
codegen_flags: <defaults>
</compile_context>

<pallas_src>
import jax
import jax.numpy as jnp
from jax.experimental import pallas as pl
from jax.experimental.pallas import tpu as pltpu

LANE = 128  # TPU lane width


def _round_up(n, m):
    return ((n + m - 1) // m) * m


def mlp_kernel(x_ref, w1_ref, b1_ref, w2_ref, b2_ref, w3_ref, b3_ref, o_ref):
    # fc1 + ReLU  (MXU matmul, f32 accumulation; bias/ReLU on the VPU)
    h1 = jnp.dot(x_ref[...], w1_ref[...], preferred_element_type=jnp.float32)
    h1 = jnp.maximum(h1 + b1_ref[...], 0.0)
    # fc2 + ReLU
    h2 = jnp.dot(h1, w2_ref[...], preferred_element_type=jnp.float32)
    h2 = jnp.maximum(h2 + b2_ref[...], 0.0)
    # fc3 (no activation) — output is lane-dense (padded to 128 lanes)
    h3 = jnp.dot(h2, w3_ref[...], preferred_element_type=jnp.float32)
    o_ref[...] = (h3 + b3_ref[...]).astype(o_ref.dtype)


def simple_model_forward(x, params, *, block_b=128):
    """x: (B, input_size) f32.  params: (in, out) weights, (1, out) biases.

    Pads batch and all feature dims to lane/sublane-friendly sizes, runs a
    batch-tiled Pallas kernel with resident weights, and slices the real
    (B, output_size) result back out.
    """
    w1, b1 = params["w1"], params["b1"]
    w2, b2 = params["w2"], params["b2"]
    w3, b3 = params["w3"], params["b3"]

    B, in_size = x.shape
    h1_size, h2_size, out_size = w1.shape[1], w2.shape[1], w3.shape[1]

    # Padded (lane-dense) dims.
    in_p = _round_up(in_size, LANE)
    h1_p = _round_up(h1_size, LANE)
    h2_p = _round_up(h2_size, LANE)
    out_p = _round_up(out_size, LANE)
    Bp = _round_up(B, block_b)

    pad2 = lambda a, r, c: jnp.pad(
        a, ((0, r - a.shape[0]), (0, c - a.shape[1]))
    )

    x_p = pad2(x, Bp, in_p)
    w1_p, b1_p = pad2(w1, in_p, h1_p), pad2(b1, 1, h1_p)
    w2_p, b2_p = pad2(w2, h1_p, h2_p), pad2(b2, 1, h2_p)
    w3_p, b3_p = pad2(w3, h2_p, out_p), pad2(b3, 1, out_p)

    grid = (Bp // block_b,)

    # Weights / biases: same block every step -> VMEM-resident across the grid.
    resident = lambda shape: pl.BlockSpec(shape, lambda i: (0, 0))

    out_padded = pl.pallas_call(
        mlp_kernel,
        out_shape=jax.ShapeDtypeStruct((Bp, out_p), jnp.float32),
        grid=grid,
        in_specs=[
            pl.BlockSpec((block_b, in_p), lambda i: (i, 0)),   # x tile
            resident((in_p, h1_p)), resident((1, h1_p)),       # w1, b1
            resident((h1_p, h2_p)), resident((1, h2_p)),       # w2, b2
            resident((h2_p, out_p)), resident((1, out_p)),     # w3, b3
        ],
        out_specs=pl.BlockSpec((block_b, out_p), lambda i: (i, 0)),
        compiler_params=pltpu.CompilerParams(
            dimension_semantics=("parallel",),  # shard batch across TCs (v7x)
        ),
    )(x_p, w1_p, b1_p, w2_p, b2_p, w3_p, b3_p)

    return out_padded[:B, :out_size]


def init_params(key, input_size=10, hidden_size=50, output_size=1):
    """Deterministic init mimicking nn.Linear's U(-1/sqrt(fan_in), 1/sqrt(fan_in))."""
    def linear(k, fan_in, fan_out):
        kw, kb = jax.random.split(k)
        bound = 1.0 / jnp.sqrt(fan_in)
        # stored as (in, out) so the kernel does x @ W
        w = jax.random.uniform(kw, (fan_in, fan_out), jnp.float32, -bound, bound)
        b = jax.random.uniform(kb, (1, fan_out), jnp.float32, -bound, bound)
        return w, b

    k1, k2, k3 = jax.random.split(key, 3)
    w1, b1 = linear(k1, input_size, hidden_size)
    w2, b2 = linear(k2, hidden_size, hidden_size // 2)
    w3, b3 = linear(k3, hidden_size // 2, output_size)
    return {"w1": w1, "b1": b1, "w2": w2, "b2": b2, "w3": w3, "b3": b3}


def reference_forward(x, p):
    h = jnp.maximum(x @ p["w1"] + p["b1"], 0.0)
    h = jnp.maximum(h @ p["w2"] + p["b2"], 0.0)
    return h @ p["w3"] + p["b3"]


if __name__ == "__main__":
    key = jax.random.PRNGKey(0)
    kp, kx = jax.random.split(key)

    input_size, hidden_size, output_size = 10, 50, 1
    batch = 8  # tiny demo batch; wrapper pads to the 128-row MXU tile

    params = init_params(kp, input_size, hidden_size, output_size)
    x = jax.random.normal(kx, (batch, input_size), jnp.float32)

    out = simple_model_forward(x, params)
    out = jax.block_until_ready(out)

    ref = reference_forward(x, params)
    assert out.shape == (batch, output_size)
    assert jnp.allclose(out, ref, atol=1e-5, rtol=1e-5)

    # Also exercise a multi-tile batch so the grid actually iterates/pipelines.
    x_big = jax.random.normal(kx, (300, input_size), jnp.float32)
    out_big = jax.block_until_ready(simple_model_forward(x_big, params))
    assert jnp.allclose(out_big, reference_forward(x_big, params),
                        atol=1e-5, rtol=1e-5)

    print("KERNEL_OK")
</pallas_src>

<mosaic_0001>
module attributes {stable_mosaic.version = 11 : i64} {
  func.func @mlp_kernel(%arg0: i32, %arg1: memref<128x128xf32, #tpu.memory_space<vmem>>, %arg2: memref<128x128xf32, #tpu.memory_space<vmem>>, %arg3: memref<1x128xf32, #tpu.memory_space<vmem>>, %arg4: memref<128x128xf32, #tpu.memory_space<vmem>>, %arg5: memref<1x128xf32, #tpu.memory_space<vmem>>, %arg6: memref<128x128xf32, #tpu.memory_space<vmem>>, %arg7: memref<1x128xf32, #tpu.memory_space<vmem>>, %arg8: memref<128x128xf32, #tpu.memory_space<vmem>>) attributes {dimension_semantics = [#tpu.dimension_semantics<parallel>], iteration_bounds = array<i64: 1>, scalar_prefetch = 0 : i64, scratch_operands = 0 : i64, tpu.core_type = #tpu.core_type<tc>, window_params = [{transform_indices = @transform_0, window_bounds = array<i64: 128, 128>}, {pipeline_mode = #tpu.pipeline_mode<synchronous>, transform_indices = @transform_1, window_bounds = array<i64: 128, 128>}, {pipeline_mode = #tpu.pipeline_mode<synchronous>, transform_indices = @transform_2, window_bounds = array<i64: 1, 128>}, {pipeline_mode = #tpu.pipeline_mode<synchronous>, transform_indices = @transform_3, window_bounds = array<i64: 128, 128>}, {pipeline_mode = #tpu.pipeline_mode<synchronous>, transform_indices = @transform_4, window_bounds = array<i64: 1, 128>}, {pipeline_mode = #tpu.pipeline_mode<synchronous>, transform_indices = @transform_5, window_bounds = array<i64: 128, 128>}, {pipeline_mode = #tpu.pipeline_mode<synchronous>, transform_indices = @transform_6, window_bounds = array<i64: 1, 128>}, {transform_indices = @transform_7, window_bounds = array<i64: 128, 128>}]} {
    %c0 = arith.constant 0 : index
    %c0_0 = arith.constant 0 : index
    %0 = vector.load %arg1[%c0, %c0_0] : memref<128x128xf32, #tpu.memory_space<vmem>>, vector<128x128xf32>
    %c0_1 = arith.constant 0 : index
    %c0_2 = arith.constant 0 : index
    %1 = vector.load %arg2[%c0_1, %c0_2] : memref<128x128xf32, #tpu.memory_space<vmem>>, vector<128x128xf32>
    %cst = arith.constant dense<0.000000e+00> : vector<128x128xf32>
    %2 = tpu.matmul %0, %1, %cst {dimension_numbers = #tpu.dot_dimension_numbers<[1], [0], [0], [1], [0, 0, 1, 1], [], []>} : vector<128x128xf32>, vector<128x128xf32>, vector<128x128xf32> -> vector<128x128xf32>
    %c0_3 = arith.constant 0 : index
    %c0_4 = arith.constant 0 : index
    %3 = vector.load %arg3[%c0_3, %c0_4] : memref<1x128xf32, #tpu.memory_space<vmem>>, vector<1x128xf32>
    %4 = vector.broadcast %3 : vector<1x128xf32> to vector<128x128xf32>
    %5 = arith.addf %2, %4 : vector<128x128xf32>
    %cst_5 = arith.constant 0.000000e+00 : f32
    %6 = vector.broadcast %cst_5 : f32 to vector<128x128xf32>
    %7 = arith.maximumf %5, %6 : vector<128x128xf32>
    %c0_6 = arith.constant 0 : index
    %c0_7 = arith.constant 0 : index
    %8 = vector.load %arg4[%c0_6, %c0_7] : memref<128x128xf32, #tpu.memory_space<vmem>>, vector<128x128xf32>
    %cst_8 = arith.constant dense<0.000000e+00> : vector<128x128xf32>
    %9 = tpu.matmul %7, %8, %cst_8 {dimension_numbers = #tpu.dot_dimension_numbers<[1], [0], [0], [1], [0, 0, 1, 1], [], []>} : vector<128x128xf32>, vector<128x128xf32>, vector<128x128xf32> -> vector<128x128xf32>
    %c0_9 = arith.constant 0 : index
    %c0_10 = arith.constant 0 : index
    %10 = vector.load %arg5[%c0_9, %c0_10] : memref<1x128xf32, #tpu.memory_space<vmem>>, vector<1x128xf32>
    %11 = vector.broadcast %10 : vector<1x128xf32> to vector<128x128xf32>
    %12 = arith.addf %9, %11 : vector<128x128xf32>
    %cst_11 = arith.constant 0.000000e+00 : f32
    %13 = vector.broadcast %cst_11 : f32 to vector<128x128xf32>
    %14 = arith.maximumf %12, %13 : vector<128x128xf32>
    %c0_12 = arith.constant 0 : index
    %c0_13 = arith.constant 0 : index
    %15 = vector.load %arg6[%c0_12, %c0_13] : memref<128x128xf32, #tpu.memory_space<vmem>>, vector<128x128xf32>
    %cst_14 = arith.constant dense<0.000000e+00> : vector<128x128xf32>
    %16 = tpu.matmul %14, %15, %cst_14 {dimension_numbers = #tpu.dot_dimension_numbers<[1], [0], [0], [1], [0, 0, 1, 1], [], []>} : vector<128x128xf32>, vector<128x128xf32>, vector<128x128xf32> -> vector<128x128xf32>
    %c0_15 = arith.constant 0 : index
    %c0_16 = arith.constant 0 : index
    %17 = vector.load %arg7[%c0_15, %c0_16] : memref<1x128xf32, #tpu.memory_space<vmem>>, vector<1x128xf32>
    %18 = vector.broadcast %17 : vector<1x128xf32> to vector<128x128xf32>
    %19 = arith.addf %16, %18 : vector<128x128xf32>
    %c0_17 = arith.constant 0 : index
    %c0_18 = arith.constant 0 : index
    %20 = vector.load %arg8[%c0_17, %c0_18] : memref<128x128xf32, #tpu.memory_space<vmem>>, vector<128x128xf32>
    tpu.vector_store %arg8[%c0_17, %c0_18], %19 {strides = array<i32>} : memref<128x128xf32, #tpu.memory_space<vmem>>, vector<128x128xf32>,
    return
  }
  func.func @transform_0(%arg0: i32) -> (i32, i32) {
    %c0_i32 = arith.constant 0 : i32
    %c0_i32_0 = arith.constant 0 : i32
    return %arg0, %c0_i32 : i32, i32
  }
  func.func @transform_1(%arg0: i32) -> (i32, i32) {
    %c0_i32 = arith.constant 0 : i32
    %c0_i32_0 = arith.constant 0 : i32
    %c0_i32_1 = arith.constant 0 : i32
    return %c0_i32, %c0_i32_0 : i32, i32
  }
  func.func @transform_2(%arg0: i32) -> (i32, i32) {
    %c0_i32 = arith.constant 0 : i32
    %c0_i32_0 = arith.constant 0 : i32
    %c0_i32_1 = arith.constant 0 : i32
    return %c0_i32, %c0_i32_0 : i32, i32
  }
  func.func @transform_3(%arg0: i32) -> (i32, i32) {
    %c0_i32 = arith.constant 0 : i32
    %c0_i32_0 = arith.constant 0 : i32
    %c0_i32_1 = arith.constant 0 : i32
    return %c0_i32, %c0_i32_0 : i32, i32
  }
  func.func @transform_4(%arg0: i32) -> (i32, i32) {
    %c0_i32 = arith.constant 0 : i32
    %c0_i32_0 = arith.constant 0 : i32
    %c0_i32_1 = arith.constant 0 : i32
    return %c0_i32, %c0_i32_0 : i32, i32
  }
  func.func @transform_5(%arg0: i32) -> (i32, i32) {
    %c0_i32 = arith.constant 0 : i32
    %c0_i32_0 = arith.constant 0 : i32
    %c0_i32_1 = arith.constant 0 : i32
    return %c0_i32, %c0_i32_0 : i32, i32
  }
  func.func @transform_6(%arg0: i32) -> (i32, i32) {
    %c0_i32 = arith.constant 0 : i32
    %c0_i32_0 = arith.constant 0 : i32
    %c0_i32_1 = arith.constant 0 : i32
    return %c0_i32, %c0_i32_0 : i32, i32
  }
  func.func @transform_7(%arg0: i32) -> (i32, i32) {
    %c0_i32 = arith.constant 0 : i32
    %c0_i32_0 = arith.constant 0 : i32
    return %arg0, %c0_i32 : i32, i32
  }
}

</mosaic_0001>

<llo_original>
// kernel: tpu_custom_call.1
$region0: #{tpu_custom_call.1}
  #allocation0 [shape = 'u32[]', space=smem, size = 0x4, offset = 0x4, fixed_abs, tag = 'smem constant byte address 0x4 - core index']
  #allocation1 [shape = 'u32[72,128]{1,0:T(1,128)}', space=vmem, size = 0x9000, scoped, tag = 'internal scratch']
  %s0 = inlined_call_operand.hbm [shape: f32[128,128], index: 0, kind: input, shape index: {}]
  %s1 = inlined_call_operand.hbm [shape: f32[128,128], index: 1, kind: input, shape index: {}]
  %s2 = inlined_call_operand.vmem [shape: f32[1,128], index: 2, kind: input, shape index: {}]
  %s3 = inlined_call_operand.hbm [shape: f32[128,128], index: 3, kind: input, shape index: {}]
  %s4 = inlined_call_operand.vmem [shape: f32[1,128], index: 4, kind: input, shape index: {}]
  %s5 = inlined_call_operand.hbm [shape: f32[128,128], index: 5, kind: input, shape index: {}]
  %s6 = inlined_call_operand.vmem [shape: f32[1,128], index: 6, kind: input, shape index: {}]
  %s7 = inlined_call_operand.hbm [shape: f32[128,128], index: 7, kind: output, shape index: {}]
  %s8 = sld [smem:[#allocation0]]
  $region54: #{tpu_custom_call.1} parent=0
    _
  %s10 = ssub.s32 1, %s8
  %s11 = scalar_select 0, %s10, %s8
  $region1: #{tpu_custom_call.1} parent=0
    #allocation2 [shape = 'u8[65536]{0}', space=vmem, size = 0x10000, scoped, tag = 'input window, operand 0, single buffered']
    #allocation3 [shape = 's32[1]{0}', space=sflag, size = 0x4, scoped, tag = 'scoped memory for tpu_custom_call.1']
    #allocation4 [shape = 's32[1]{0}', space=sflag, size = 0x4, scoped, tag = 'scoped memory for tpu_custom_call.1']
    #allocation5 [shape = 'u8[65536]{0}', space=vmem, size = 0x10000, scoped, tag = 'input window, operand 1, single buffered']
    #allocation6 [shape = 's32[1]{0}', space=sflag, size = 0x4, scoped, tag = 'scoped memory for tpu_custom_call.1']
    #allocation7 [shape = 'u8[65536]{0}', space=vmem, size = 0x10000, scoped, tag = 'input window, operand 3, single buffered']
    #allocation8 [shape = 'u8[65536]{0}', space=vmem, size = 0x10000, scoped, tag = 'input window, operand 5, single buffered']
    #allocation9 [shape = 's32[1]{0}', space=sflag, size = 0x4, scoped, tag = 'scoped memory for tpu_custom_call.1']
    #allocation10 [shape = 'u8[65536]{0}', space=vmem, size = 0x10000, scoped, tag = 'output window, operand 0, single buffered']
    %12 = vsyncpa [#allocation3], 0
    %13 = vsyncpa [#allocation6], 0
    %14 = vsyncpa [#allocation9], 0
    %15 = vsyncpa [#allocation4], 0
    // Predicated region
    $region2: #{tpu_custom_call.1} parent=1 // pred_check
      _
    $region3: #{tpu_custom_call.1} parent=1 // pred_check_branch
      %17 = sbr.rel (0) target = $region5
    $region4: #{tpu_custom_call.1} parent=1 // pred_region
      %19 = vsyncadd [#allocation3], 0
      %s20 = sshll.u32 %s0, 4
      %s21 = int_to_ptr.hbm [resolvable:$true] %s20
      %s22 = sshll.u32 [#allocation2], 4
      %s23 = int_to_ptr.vmem [resolvable:$true] %s22
      %28 = dma.hbm_to_vmem [thread:$0]  %s21, 2048, %s23, [#allocation3], 128, 128, 8
    $region5: #{tpu_custom_call.1} parent=1 // pred_fallthru
      _
    // Predicated region
    $region6: #{tpu_custom_call.1} parent=1 // pred_check
      _
    $region7: #{tpu_custom_call.1} parent=1 // pred_check_branch
      %30 = sbr.rel (0) target = $region9
    $region8: #{tpu_custom_call.1} parent=1 // pred_region
      %32 = vsyncadd [#allocation6], 0
      %s33 = sshll.u32 %s1, 4
      %s34 = int_to_ptr.hbm [resolvable:$true] %s33
      %s35 = sshll.u32 [#allocation5], 4
      %s36 = int_to_ptr.vmem [resolvable:$true] %s35
      %41 = dma.hbm_to_vmem [thread:$0]  %s34, 2048, %s36, [#allocation6], 128, 128, 8
    $region9: #{tpu_custom_call.1} parent=1 // pred_fallthru
      _
    // Predicated region
    $region10: #{tpu_custom_call.1} parent=1 // pred_check
      _
    $region11: #{tpu_custom_call.1} parent=1 // pred_check_branch
      %43 = sbr.rel (0) target = $region13
    $region12: #{tpu_custom_call.1} parent=1 // pred_region
      _
    $region13: #{tpu_custom_call.1} parent=1 // pred_fallthru
      _
    // Predicated region
    $region14: #{tpu_custom_call.1} parent=1 // pred_check
      _
    $region15: #{tpu_custom_call.1} parent=1 // pred_check_branch
      %45 = sbr.rel (0) target = $region17
    $region16: #{tpu_custom_call.1} parent=1 // pred_region
      %47 = vsyncadd [#allocation6], 0
      %s48 = sshll.u32 %s3, 4
      %s49 = int_to_ptr.hbm [resolvable:$true] %s48
      %s50 = sshll.u32 [#allocation7], 4
      %s51 = int_to_ptr.vmem [resolvable:$true] %s50
      %56 = dma.hbm_to_vmem [thread:$0]  %s49, 2048, %s51, [#allocation6], 128, 128, 8
    $region17: #{tpu_custom_call.1} parent=1 // pred_fallthru
      _
    // Predicated region
    $region18: #{tpu_custom_call.1} parent=1 // pred_check
      _
    $region19: #{tpu_custom_call.1} parent=1 // pred_check_branch
      %58 = sbr.rel (0) target = $region21
    $region20: #{tpu_custom_call.1} parent=1 // pred_region
      _
    $region21: #{tpu_custom_call.1} parent=1 // pred_fallthru
      _
    // Predicated region
    $region22: #{tpu_custom_call.1} parent=1 // pred_check
      _
    $region23: #{tpu_custom_call.1} parent=1 // pred_check_branch
      %60 = sbr.rel (0) target = $region25
    $region24: #{tpu_custom_call.1} parent=1 // pred_region
      %62 = vsyncadd [#allocation9], 0
      %s63 = sshll.u32 %s5, 4
      %s64 = int_to_ptr.hbm [resolvable:$true] %s63
      %s65 = sshll.u32 [#allocation8], 4
      %s66 = int_to_ptr.vmem [resolvable:$true] %s65
      %71 = dma.hbm_to_vmem [thread:$0]  %s64, 2048, %s66, [#allocation9], 128, 128, 8
    $region25: #{tpu_custom_call.1} parent=1 // pred_fallthru
      _
    // Predicated region
    $region26: #{tpu_custom_call.1} parent=1 // pred_check
      _
    $region27: #{tpu_custom_call.1} parent=1 // pred_check_branch
      %73 = sbr.rel (0) target = $region29
    $region28: #{tpu_custom_call.1} parent=1 // pred_region
      _
    $region29: #{tpu_custom_call.1} parent=1 // pred_fallthru
      _
    // Predicated region
    $region30: #{tpu_custom_call.1} parent=1 // pred_check
      _
    $region31: #{tpu_custom_call.1} parent=1 // pred_check_branch
      %75 = sbr.rel (0) target = $region33
    $region32: #{tpu_custom_call.1} parent=1 // pred_region
      %77 = dma.done [#allocation3], 2048
    $region33: #{tpu_custom_call.1} parent=1 // pred_fallthru
      _
    // Predicated region
    $region34: #{tpu_custom_call.1} parent=1 // pred_check
      _
    $region35: #{tpu_custom_call.1} parent=1 // pred_check_branch
      %79 = sbr.rel (0) target = $region37
    $region36: #{tpu_custom_call.1} parent=1 // pred_region
      %81 = dma.done [#allocation6], 2048
    $region37: #{tpu_custom_call.1} parent=1 // pred_fallthru
      _
    // Predicated region
    $region38: #{tpu_custom_call.1} parent=1 // pred_check
      _
    $region39: #{tpu_custom_call.1} parent=1 // pred_check_branch
      %83 = sbr.rel (0) target = $region41
    $region40: #{tpu_custom_call.1} parent=1 // pred_region
      %85 = dma.done [#allocation6], 2048
    $region41: #{tpu_custom_call.1} parent=1 // pred_fallthru
      _
    // Predicated region
    $region42: #{tpu_custom_call.1} parent=1 // pred_check
      _
    $region43: #{tpu_custom_call.1} parent=1 // pred_check_branch
      %87 = sbr.rel (0) target = $region45
    $region44: #{tpu_custom_call.1} parent=1 // pred_region
      %89 = dma.done [#allocation9], 2048
    $region45: #{tpu_custom_call.1} parent=1 // pred_fallthru
      _
    %v90 = vld [vmem:[#allocation2] sm:$0xff]
    %v91 = vld [vmem:[#allocation2 + $0x8] sm:$0xff]
    %v92 = vld [vmem:[#allocation2 + $0x10] sm:$0xff]
    %v93 = vld [vmem:[#allocation2 + $0x18] sm:$0xff]
    %v94 = vld [vmem:[#allocation2 + $0x20] sm:$0xff]
    %v95 = vld [vmem:[#allocation2 + $0x28] sm:$0xff]
    %v96 = vld [vmem:[#allocation2 + $0x30] sm:$0xff]
    %v97 = vld [vmem:[#allocation2 + $0x38] sm:$0xff]
    %v98 = vld [vmem:[#allocation2 + $0x40] sm:$0xff]
    %v99 = vld [vmem:[#allocation2 + $0x48] sm:$0xff]
    %v100 = vld [vmem:[#allocation2 + $0x50] sm:$0xff]
    %v101 = vld [vmem:[#allocation2 + $0x58] sm:$0xff]
    %v102 = vld [vmem:[#allocation2 + $0x60] sm:$0xff]
    %v103 = vld [vmem:[#allocation2 + $0x68] sm:$0xff]
    %v104 = vld [vmem:[#allocation2 + $0x70] sm:$0xff]
    %v105 = vld [vmem:[#allocation2 + $0x78] sm:$0xff]
    %v106 = vld [vmem:[#allocation5] sm:$0xff]
    %v107 = vld [vmem:[#allocation5 + $0x8] sm:$0xff]
    %v108 = vld [vmem:[#allocation5 + $0x10] sm:$0xff]
    %v109 = vld [vmem:[#allocation5 + $0x18] sm:$0xff]
    %v110 = vld [vmem:[#allocation5 + $0x20] sm:$0xff]
    %v111 = vld [vmem:[#allocation5 + $0x28] sm:$0xff]
    %v112 = vld [vmem:[#allocation5 + $0x30] sm:$0xff]
    %v113 = vld [vmem:[#allocation5 + $0x38] sm:$0xff]
    %v114 = vld [vmem:[#allocation5 + $0x40] sm:$0xff]
    %v115 = vld [vmem:[#allocation5 + $0x48] sm:$0xff]
    %v116 = vld [vmem:[#allocation5 + $0x50] sm:$0xff]
    %v117 = vld [vmem:[#allocation5 + $0x58] sm:$0xff]
    %v118 = vld [vmem:[#allocation5 + $0x60] sm:$0xff]
    %v119 = vld [vmem:[#allocation5 + $0x68] sm:$0xff]
    %v120 = vld [vmem:[#allocation5 + $0x70] sm:$0xff]
    %v121 = vld [vmem:[#allocation5 + $0x78] sm:$0xff]
    %v122 = vld [vmem:[%s2] sm:$0x1]
    %v124 = vperm.slane %v122, 0
    %126 = vmatpush.msra.mxu0 %v121
    %127 = vmatpush.msra.mxu0 %v120
    %128 = vmatpush.msra.mxu0 %v119
    %129 = vmatpush.msra.mxu0 %v118
    %130 = vmatpush.msra.mxu0 %v117
    %131 = vmatpush.msra.mxu0 %v116
    %132 = vmatpush.msra.mxu0 %v115
    %133 = vmatpush.msra.mxu0 %v114
    %134 = vmatpush.msra.mxu0 %v113
    %135 = vmatpush.msra.mxu0 %v112
    %136 = vmatpush.msra.mxu0 %v111
    %137 = vmatpush.msra.mxu0 %v110
    %138 = vmatpush.msra.mxu0 %v109
    %139 = vmatpush.msra.mxu0 %v108
    %140 = vmatpush.msra.mxu0 %v107
    %141 = vmatpush.msra.mxu0 %v106
    %142 = vmatmul.f32.gmra.mxu0 %v90
    %v143 = vpop.f32.mrf.mxu0
    %v144 = vadd.f32 %v124, %v143
    %145 = vmatmul.f32.gmra.mxu0 %v91
    %v146 = vpop.f32.mrf.mxu0
    %v147 = vadd.f32 %v124, %v146
    %148 = vmatmul.f32.gmra.mxu0 %v92
    %v149 = vpop.f32.mrf.mxu0
    %v150 = vadd.f32 %v124, %v149
    %151 = vmatmul.f32.gmra.mxu0 %v93
    %v152 = vpop.f32.mrf.mxu0
    %v153 = vadd.f32 %v124, %v152
    %154 = vmatmul.f32.gmra.mxu0 %v94
    %v155 = vpop.f32.mrf.mxu0
    %v156 = vadd.f32 %v124, %v155
    %157 = vmatmul.f32.gmra.mxu0 %v95
    %v158 = vpop.f32.mrf.mxu0
    %v159 = vadd.f32 %v124, %v158
    %160 = vmatmul.f32.gmra.mxu0 %v96
    %v161 = vpop.f32.mrf.mxu0
    %v162 = vadd.f32 %v124, %v161
    %163 = vmatmul.f32.gmra.mxu0 %v97
    %v164 = vpop.f32.mrf.mxu0
    %v165 = vadd.f32 %v124, %v164
    %166 = vmatmul.f32.gmra.mxu0 %v98
    %v167 = vpop.f32.mrf.mxu0
    %v168 = vadd.f32 %v124, %v167
    %169 = vmatmul.f32.gmra.mxu0 %v99
    %v170 = vpop.f32.mrf.mxu0
    %v171 = vadd.f32 %v124, %v170
    %172 = vmatmul.f32.gmra.mxu0 %v100
    %v173 = vpop.f32.mrf.mxu0
    %v174 = vadd.f32 %v124, %v173
    %175 = vmatmul.f32.gmra.mxu0 %v101
    %v176 = vpop.f32.mrf.mxu0
    %v177 = vadd.f32 %v124, %v176
    %178 = vmatmul.f32.gmra.mxu0 %v102
    %v179 = vpop.f32.mrf.mxu0
    %v180 = vadd.f32 %v124, %v179
    %181 = vmatmul.f32.gmra.mxu0 %v103
    %v182 = vpop.f32.mrf.mxu0
    %v183 = vadd.f32 %v124, %v182
    %184 = vmatmul.f32.gmra.mxu0 %v104
    %v185 = vpop.f32.mrf.mxu0
    %v186 = vadd.f32 %v124, %v185
    %187 = vmatmul.f32.gmra.mxu0 %v105
    %v188 = vpop.f32.mrf.mxu0
    %v189 = vadd.f32 %v124, %v188
    %190 = vdwg.mxu0
    %v191 = vmax.f32 %v144, 0.0
    %v192 = vmax.f32 %v147, 0.0
    %v193 = vmax.f32 %v150, 0.0
    %v194 = vmax.f32 %v153, 0.0
    %v195 = vmax.f32 %v156, 0.0
    %v196 = vmax.f32 %v159, 0.0
    %v197 = vmax.f32 %v162, 0.0
    %v198 = vmax.f32 %v165, 0.0
    %v199 = vmax.f32 %v168, 0.0
    %v200 = vmax.f32 %v171, 0.0
    %v201 = vmax.f32 %v174, 0.0
    %v202 = vmax.f32 %v177, 0.0
    %v203 = vmax.f32 %v180, 0.0
    %v204 = vmax.f32 %v183, 0.0
    %v205 = vmax.f32 %v186, 0.0
    %v206 = vmax.f32 %v189, 0.0
    %v207 = vld [vmem:[#allocation7] sm:$0xff]
    %v208 = vld [vmem:[#allocation7 + $0x8] sm:$0xff]
    %v209 = vld [vmem:[#allocation7 + $0x10] sm:$0xff]
    %v210 = vld [vmem:[#allocation7 + $0x18] sm:$0xff]
    %v211 = vld [vmem:[#allocation7 + $0x20] sm:$0xff]
    %v212 = vld [vmem:[#allocation7 + $0x28] sm:$0xff]
    %v213 = vld [vmem:[#allocation7 + $0x30] sm:$0xff]
    %v214 = vld [vmem:[#allocation7 + $0x38] sm:$0xff]
    %v215 = vld [vmem:[#allocation7 + $0x40] sm:$0xff]
    %v216 = vld [vmem:[#allocation7 + $0x48] sm:$0xff]
    %v217 = vld [vmem:[#allocation7 + $0x50] sm:$0xff]
    %v218 = vld [vmem:[#allocation7 + $0x58] sm:$0xff]
    %v219 = vld [vmem:[#allocation7 + $0x60] sm:$0xff]
    %v220 = vld [vmem:[#allocation7 + $0x68] sm:$0xff]
    %v221 = vld [vmem:[#allocation7 + $0x70] sm:$0xff]
    %v222 = vld [vmem:[#allocation7 + $0x78] sm:$0xff]
    %v223 = vld [vmem:[%s4] sm:$0x1]
    %v225 = vperm.slane %v223, 0
    %227 = vmatpush.msra.mxu0 %v222
    %228 = vmatpush.msra.mxu0 %v221
    %229 = vmatpush.msra.mxu0 %v220
    %230 = vmatpush.msra.mxu0 %v219
    %231 = vmatpush.msra.mxu0 %v218
    %232 = vmatpush.msra.mxu0 %v217
    %233 = vmatpush.msra.mxu0 %v216
    %234 = vmatpush.msra.mxu0 %v215
    %235 = vmatpush.msra.mxu0 %v214
    %236 = vmatpush.msra.mxu0 %v213
    %237 = vmatpush.msra.mxu0 %v212
    %238 = vmatpush.msra.mxu0 %v211
    %239 = vmatpush.msra.mxu0 %v210
    %240 = vmatpush.msra.mxu0 %v209
    %241 = vmatpush.msra.mxu0 %v208
    %242 = vmatpush.msra.mxu0 %v207
    %243 = vmatmul.f32.gmra.mxu0 %v191
    %v244 = vpop.f32.mrf.mxu0
    %v245 = vadd.f32 %v225, %v244
    %246 = vmatmul.f32.gmra.mxu0 %v192
    %v247 = vpop.f32.mrf.mxu0
    %v248 = vadd.f32 %v225, %v247
    %249 = vmatmul.f32.gmra.mxu0 %v193
    %v250 = vpop.f32.mrf.mxu0
    %v251 = vadd.f32 %v225, %v250
    %252 = vmatmul.f32.gmra.mxu0 %v194
    %v253 = vpop.f32.mrf.mxu0
    %v254 = vadd.f32 %v225, %v253
    %255 = vmatmul.f32.gmra.mxu0 %v195
    %v256 = vpop.f32.mrf.mxu0
    %v257 = vadd.f32 %v225, %v256
    %258 = vmatmul.f32.gmra.mxu0 %v196
    %v259 = vpop.f32.mrf.mxu0
    %v260 = vadd.f32 %v225, %v259
    %261 = vmatmul.f32.gmra.mxu0 %v197
    %v262 = vpop.f32.mrf.mxu0
    %v263 = vadd.f32 %v225, %v262
    %264 = vmatmul.f32.gmra.mxu0 %v198
    %v265 = vpop.f32.mrf.mxu0
    %v266 = vadd.f32 %v225, %v265
    %267 = vmatmul.f32.gmra.mxu0 %v199
    %v268 = vpop.f32.mrf.mxu0
    %v269 = vadd.f32 %v225, %v268
    %270 = vmatmul.f32.gmra.mxu0 %v200
    %v271 = vpop.f32.mrf.mxu0
    %v272 = vadd.f32 %v225, %v271
    %273 = vmatmul.f32.gmra.mxu0 %v201
    %v274 = vpop.f32.mrf.mxu0
    %v275 = vadd.f32 %v225, %v274
    %276 = vmatmul.f32.gmra.mxu0 %v202
    %v277 = vpop.f32.mrf.mxu0
    %v278 = vadd.f32 %v225, %v277
    %279 = vmatmul.f32.gmra.mxu0 %v203
    %v280 = vpop.f32.mrf.mxu0
    %v281 = vadd.f32 %v225, %v280
    %282 = vmatmul.f32.gmra.mxu0 %v204
    %v283 = vpop.f32.mrf.mxu0
    %v284 = vadd.f32 %v225, %v283
    %285 = vmatmul.f32.gmra.mxu0 %v205
    %v286 = vpop.f32.mrf.mxu0
    %v287 = vadd.f32 %v225, %v286
    %288 = vmatmul.f32.gmra.mxu0 %v206
    %v289 = vpop.f32.mrf.mxu0
    %v290 = vadd.f32 %v225, %v289
    %291 = vdwg.mxu0
    %v292 = vmax.f32 %v245, 0.0
    %v293 = vmax.f32 %v248, 0.0
    %v294 = vmax.f32 %v251, 0.0
    %v295 = vmax.f32 %v254, 0.0
    %v296 = vmax.f32 %v257, 0.0
    %v297 = vmax.f32 %v260, 0.0
    %v298 = vmax.f32 %v263, 0.0
    %v299 = vmax.f32 %v266, 0.0
    %v300 = vmax.f32 %v269, 0.0
    %v301 = vmax.f32 %v272, 0.0
    %v302 = vmax.f32 %v275, 0.0
    %v303 = vmax.f32 %v278, 0.0
    %v304 = vmax.f32 %v281, 0.0
    %v305 = vmax.f32 %v284, 0.0
    %v306 = vmax.f32 %v287, 0.0
    %v307 = vmax.f32 %v290, 0.0
    %v308 = vld [vmem:[#allocation8] sm:$0xff]
    %v309 = vld [vmem:[#allocation8 + $0x8] sm:$0xff]
    %v310 = vld [vmem:[#allocation8 + $0x10] sm:$0xff]
    %v311 = vld [vmem:[#allocation8 + $0x18] sm:$0xff]
    %v312 = vld [vmem:[#allocation8 + $0x20] sm:$0xff]
    %v313 = vld [vmem:[#allocation8 + $0x28] sm:$0xff]
    %v314 = vld [vmem:[#allocation8 + $0x30] sm:$0xff]
    %v315 = vld [vmem:[#allocation8 + $0x38] sm:$0xff]
    %v316 = vld [vmem:[#allocation8 + $0x40] sm:$0xff]
    %v317 = vld [vmem:[#allocation8 + $0x48] sm:$0xff]
    %v318 = vld [vmem:[#allocation8 + $0x50] sm:$0xff]
    %v319 = vld [vmem:[#allocation8 + $0x58] sm:$0xff]
    %v320 = vld [vmem:[#allocation8 + $0x60] sm:$0xff]
    %v321 = vld [vmem:[#allocation8 + $0x68] sm:$0xff]
    %v322 = vld [vmem:[#allocation8 + $0x70] sm:$0xff]
    %v323 = vld [vmem:[#allocation8 + $0x78] sm:$0xff]
    %v324 = vld [vmem:[%s6] sm:$0x1]
    %v326 = vperm.slane %v324, 0
    %328 = vmatpush.msra.mxu0 %v323
    %329 = vmatpush.msra.mxu0 %v322
    %330 = vmatpush.msra.mxu0 %v321
    %331 = vmatpush.msra.mxu0 %v320
    %332 = vmatpush.msra.mxu0 %v319
    %333 = vmatpush.msra.mxu0 %v318
    %334 = vmatpush.msra.mxu0 %v317
    %335 = vmatpush.msra.mxu0 %v316
    %336 = vmatpush.msra.mxu0 %v315
    %337 = vmatpush.msra.mxu0 %v314
    %338 = vmatpush.msra.mxu0 %v313
    %339 = vmatpush.msra.mxu0 %v312
    %340 = vmatpush.msra.mxu0 %v311
    %341 = vmatpush.msra.mxu0 %v310
    %342 = vmatpush.msra.mxu0 %v309
    %343 = vmatpush.msra.mxu0 %v308
    %344 = vmatmul.f32.gmra.mxu0 %v292
    %v345 = vpop.f32.mrf.mxu0
    %v346 = vadd.f32 %v326, %v345
    %347 = vmatmul.f32.gmra.mxu0 %v293
    %v348 = vpop.f32.mrf.mxu0
    %v349 = vadd.f32 %v326, %v348
    %350 = vmatmul.f32.gmra.mxu0 %v294
    %v351 = vpop.f32.mrf.mxu0
    %v352 = vadd.f32 %v326, %v351
    %353 = vmatmul.f32.gmra.mxu0 %v295
    %v354 = vpop.f32.mrf.mxu0
    %v355 = vadd.f32 %v326, %v354
    %356 = vmatmul.f32.gmra.mxu0 %v296
    %v357 = vpop.f32.mrf.mxu0
    %v358 = vadd.f32 %v326, %v357
    %359 = vmatmul.f32.gmra.mxu0 %v297
    %v360 = vpop.f32.mrf.mxu0
    %v361 = vadd.f32 %v326, %v360
    %362 = vmatmul.f32.gmra.mxu0 %v298
    %v363 = vpop.f32.mrf.mxu0
    %v364 = vadd.f32 %v326, %v363
    %365 = vmatmul.f32.gmra.mxu0 %v299
    %v366 = vpop.f32.mrf.mxu0
    %v367 = vadd.f32 %v326, %v366
    %368 = vmatmul.f32.gmra.mxu0 %v300
    %v369 = vpop.f32.mrf.mxu0
    %v370 = vadd.f32 %v326, %v369
    %371 = vmatmul.f32.gmra.mxu0 %v301
    %v372 = vpop.f32.mrf.mxu0
    %v373 = vadd.f32 %v326, %v372
    %374 = vmatmul.f32.gmra.mxu0 %v302
    %v375 = vpop.f32.mrf.mxu0
    %v376 = vadd.f32 %v326, %v375
    %377 = vmatmul.f32.gmra.mxu0 %v303
    %v378 = vpop.f32.mrf.mxu0
    %v379 = vadd.f32 %v326, %v378
    %380 = vmatmul.f32.gmra.mxu0 %v304
    %v381 = vpop.f32.mrf.mxu0
    %v382 = vadd.f32 %v326, %v381
    %383 = vmatmul.f32.gmra.mxu0 %v305
    %v384 = vpop.f32.mrf.mxu0
    %v385 = vadd.f32 %v326, %v384
    %386 = vmatmul.f32.gmra.mxu0 %v306
    %v387 = vpop.f32.mrf.mxu0
    %v388 = vadd.f32 %v326, %v387
    %389 = vmatmul.f32.gmra.mxu0 %v307
    %v390 = vpop.f32.mrf.mxu0
    %v391 = vadd.f32 %v326, %v390
    %392 = vdwg.mxu0
    %393 = vst [vmem:[#allocation10] sm:$0xff] %v346
    %394 = vst [vmem:[#allocation10 + $0x8] sm:$0xff] %v349
    %395 = vst [vmem:[#allocation10 + $0x10] sm:$0xff] %v352
    %396 = vst [vmem:[#allocation10 + $0x18] sm:$0xff] %v355
    %397 = vst [vmem:[#allocation10 + $0x20] sm:$0xff] %v358
    %398 = vst [vmem:[#allocation10 + $0x28] sm:$0xff] %v361
    %399 = vst [vmem:[#allocation10 + $0x30] sm:$0xff] %v364
    %400 = vst [vmem:[#allocation10 + $0x38] sm:$0xff] %v367
    %401 = vst [vmem:[#allocation10 + $0x40] sm:$0xff] %v370
    %402 = vst [vmem:[#allocation10 + $0x48] sm:$0xff] %v373
    %403 = vst [vmem:[#allocation10 + $0x50] sm:$0xff] %v376
    %404 = vst [vmem:[#allocation10 + $0x58] sm:$0xff] %v379
    %405 = vst [vmem:[#allocation10 + $0x60] sm:$0xff] %v382
    %406 = vst [vmem:[#allocation10 + $0x68] sm:$0xff] %v385
    %407 = vst [vmem:[#allocation10 + $0x70] sm:$0xff] %v388
    %408 = vst [vmem:[#allocation10 + $0x78] sm:$0xff] %v391
    // Predicated region
    $region46: #{tpu_custom_call.1} parent=1 // pred_check
      _
    $region47: #{tpu_custom_call.1} parent=1 // pred_check_branch
      %410 = sbr.rel (0) target = $region49
    $region48: #{tpu_custom_call.1} parent=1 // pred_region
      %412 = vsyncadd [#allocation4], 0
      %s413 = sshll.u32 [#allocation10], 4
      %s414 = int_to_ptr.vmem [resolvable:$true] %s413
      %s415 = sshll.u32 %s7, 4
      %s416 = int_to_ptr.hbm [resolvable:$true] %s415
      %421 = dma.vmem_to_hbm [thread:$0]  %s414, 2048, %s416, [#allocation4], 128, 128, 8
    $region49: #{tpu_custom_call.1} parent=1 // pred_fallthru
      _
    // Predicated region
    $region50: #{tpu_custom_call.1} parent=1 // pred_check
      _
    $region51: #{tpu_custom_call.1} parent=1 // pred_check_branch
      %423 = sbr.rel (0) target = $region53
    $region52: #{tpu_custom_call.1} parent=1 // pred_region
      %425 = dma.done [#allocation4], 2048
    $region53: #{tpu_custom_call.1} parent=1 // pred_fallthru
      _
    %426 = vsyncpa [#allocation3], 1
    %427 = vsyncpa [#allocation6], 1
    %428 = vsyncpa [#allocation9], 1
    %429 = vsyncpa [#allocation4], 1

</llo_original>
